<compile_context>
chip_gen: v6e
topology: v6e:2x2x1
jax: 0.10.0
libtpu: 0.0.40
codegen_flags: <defaults>
</compile_context>

<pallas_src>
import functools
import math

import jax
import jax.numpy as jnp
import numpy as np
from jax import lax
from jax.experimental import pallas as pl
from jax.experimental.pallas import tpu as pltpu


# ----------------------------------------------------------------------------
# Kernel A: fused Q/K/V linear projection.
#   x tile:  [tm, H]          (row tile of [B*S, H])
#   w_qkv:   [H, 3H]          (grid-resident; query columns pre-scaled)
#   b_qkv:   [1, 3H]          (f32)
#   outputs: q/k/v [tm, H] tiles
# ----------------------------------------------------------------------------
def _qkv_proj_kernel(x_ref, w_ref, b_ref, q_ref, k_ref, v_ref, *, hidden):
    x = x_ref[...]
    xw = jnp.dot(x, w_ref[...], preferred_element_type=jnp.float32)
    xw = xw + b_ref[...]
    # Column slices are lane-tile aligned when H is a multiple of 128 (BERT).
    q_ref[...] = xw[:, :hidden].astype(q_ref.dtype)
    k_ref[...] = xw[:, hidden:2 * hidden].astype(k_ref.dtype)
    v_ref[...] = xw[:, 2 * hidden:].astype(v_ref.dtype)


def qkv_projection(x2d, w_qkv, b_qkv, *, block_rows=256):
    n, h = x2d.shape
    tm = min(block_rows, n)
    grid = (pl.cdiv(n, tm),)
    out_sd = jax.ShapeDtypeStruct((n, h), x2d.dtype)
    kernel = functools.partial(_qkv_proj_kernel, hidden=h)
    return pl.pallas_call(
        kernel,
        out_shape=(out_sd, out_sd, out_sd),
        grid_spec=pltpu.PrefetchScalarGridSpec(
            num_scalar_prefetch=0,
            grid=grid,
            in_specs=[
                pl.BlockSpec((tm, h), lambda i: (i, 0)),      # x row tile
                pl.BlockSpec((h, 3 * h), lambda i: (0, 0)),   # fused weight (resident)
                pl.BlockSpec((1, 3 * h), lambda i: (0, 0)),   # fused bias (resident)
            ],
            out_specs=(
                pl.BlockSpec((tm, h), lambda i: (i, 0)),
                pl.BlockSpec((tm, h), lambda i: (i, 0)),
                pl.BlockSpec((tm, h), lambda i: (i, 0)),
            ),
        ),
        compiler_params=pltpu.CompilerParams(
            dimension_semantics=("parallel",),
            vmem_limit_bytes=48 * 1024 * 1024,
        ),
    )(x2d, w_qkv, b_qkv)


# ----------------------------------------------------------------------------
# Kernel B: scaled-dot-product attention, all heads of one batch per step,
#           query dimension tiled.  Q/K/V/out are in merged [B, S, H] layout.
# ----------------------------------------------------------------------------
def _attn_kernel(q_ref, k_ref, v_ref, m_ref, o_ref, *, num_heads, head_size):
    q = q_ref[0]            # [tq, H]  (query already scaled by 1/sqrt(D) in W)
    k = k_ref[0]            # [S,  H]
    v = v_ref[0]            # [S,  H]
    mask = m_ref[0]         # [1,  S]  additive key-padding mask

    ctxs = []
    for h in range(num_heads):
        lo = h * head_size
        hi = lo + head_size
        qh = q[:, lo:hi]    # [tq, D]
        kh = k[:, lo:hi]    # [S,  D]
        vh = v[:, lo:hi]    # [S,  D]
        # Q @ K^T as a contraction over the head dim (no explicit transpose).
        s = lax.dot_general(qh, kh,
                            dimension_numbers=(((1,), (1,)), ((), ())),
                            preferred_element_type=jnp.float32)   # [tq, S]
        s = s + mask                                              # bcast over rows
        s = s - jnp.max(s, axis=-1, keepdims=True)
        p = jnp.exp(s)
        p = p * pl.reciprocal(jnp.sum(p, axis=-1, keepdims=True), approx=True)
        # TODO(synk): nn.Dropout(attention_dropout_prob) — identity in eval
        # mode; training dropout would use pltpu.prng_seed/prng_random_bits.
        ctxs.append(jnp.dot(p.astype(vh.dtype), vh,
                            preferred_element_type=jnp.float32))  # [tq, D]
    # Single lane-dense (tq, H) store, already in merged-heads layout.
    o_ref[0] = jnp.concatenate(ctxs, axis=-1).astype(o_ref.dtype)


def attention(q, k, v, mask, *, num_heads, head_size, block_q=512):
    # TODO(synk): for S >~ 2048 switch to flash-style online softmax over key
    # tiles to bound the [tq, S] score working set (matters most on v7x).
    b, s, h = q.shape
    tq = min(block_q, s)
    grid = (b, pl.cdiv(s, tq))
    kernel = functools.partial(_attn_kernel, num_heads=num_heads,
                               head_size=head_size)
    return pl.pallas_call(
        kernel,
        out_shape=jax.ShapeDtypeStruct((b, s, h), q.dtype),
        grid_spec=pltpu.PrefetchScalarGridSpec(
            num_scalar_prefetch=0,
            grid=grid,
            in_specs=[
                pl.BlockSpec((1, tq, h), lambda bi, qi: (bi, qi, 0)),  # Q tile
                pl.BlockSpec((1, s, h), lambda bi, qi: (bi, 0, 0)),    # K (full)
                pl.BlockSpec((1, s, h), lambda bi, qi: (bi, 0, 0)),    # V (full)
                pl.BlockSpec((1, 1, s), lambda bi, qi: (bi, 0, 0)),    # mask
            ],
            out_specs=pl.BlockSpec((1, tq, h), lambda bi, qi: (bi, qi, 0)),
        ),
        compiler_params=pltpu.CompilerParams(
            dimension_semantics=("parallel", "parallel"),
            vmem_limit_bytes=48 * 1024 * 1024,
        ),
    )(q, k, v, mask)


# ----------------------------------------------------------------------------
# Module wrapper (parameter handling + glue; no HBM transposes).
# ----------------------------------------------------------------------------
class BertSelfAttentionPallas:
    """Pallas port of BertSelfAttention (eval mode)."""

    def __init__(self, hidden_size, num_attention_heads, key,
                 compute_dtype=jnp.float32):
        if hidden_size % num_attention_heads != 0:
            raise ValueError("hidden_size must be divisible by num heads")
        self.num_heads = num_attention_heads
        self.head_size = hidden_size // num_attention_heads
        self.hidden_size = hidden_size
        self.compute_dtype = compute_dtype   # use jnp.bfloat16 on v6e/v7x

        ks = jax.random.split(key, 6)
        bound = 1.0 / math.sqrt(hidden_size)
        init_w = lambda k: jax.random.uniform(
            k, (hidden_size, hidden_size), jnp.float32, -bound, bound)
        init_b = lambda k: jax.random.uniform(
            k, (1, hidden_size), jnp.float32, -bound, bound)
        # Stored pre-transposed: x @ w == x @ W_torch.T  (used by the reference).
        self.wq, self.wk, self.wv = init_w(ks[0]), init_w(ks[1]), init_w(ks[2])
        self.bq, self.bk, self.bv = init_b(ks[3]), init_b(ks[4]), init_b(ks[5])

        # Fused QKV weight/bias with the 1/sqrt(head_size) attention scale
        # folded into the query columns (removes S^2 VPU multiplies per step).
        scale = 1.0 / math.sqrt(self.head_size)
        self.w_qkv = jnp.concatenate(
            [self.wq * scale, self.wk, self.wv], axis=1).astype(compute_dtype)
        self.b_qkv = jnp.concatenate(
            [self.bq * scale, self.bk, self.bv], axis=1).astype(jnp.float32)

    def __call__(self, hidden_states, attention_mask):
        b, s, h = hidden_states.shape
        x2d = hidden_states.reshape(b * s, h).astype(self.compute_dtype)
        q2d, k2d, v2d = qkv_projection(x2d, self.w_qkv, self.b_qkv)

        # [B*S, H] -> [B, S, H]: contiguous reshape, no head split transposes.
        q = q2d.reshape(b, s, h)
        k = k2d.reshape(b, s, h)
        v = v2d.reshape(b, s, h)

        # Standard BERT additive key-padding mask ([B,1,1,S] / [B,1,S] / [B,S])
        # kept un-broadcast as [B, 1, S]; broadcast over heads and query rows
        # happens inside the kernel.
        mask = jnp.asarray(attention_mask, jnp.float32).reshape(b, 1, s)

        ctx = attention(q, k, v, mask, num_heads=self.num_heads,
                        head_size=self.head_size)      # [B, S, H], merged heads
        return ctx.astype(hidden_states.dtype)


# ----------------------------------------------------------------------------
# Pure-JAX reference (mirrors the PyTorch module exactly).
# ----------------------------------------------------------------------------
def _reference(module, hidden_states, attention_mask):
    b, s, h = hidden_states.shape
    nh, d = module.num_heads, module.head_size
    q = hidden_states @ module.wq + module.bq[0]
    k = hidden_states @ module.wk + module.bk[0]
    v = hidden_states @ module.wv + module.bv[0]

    def sh(t):
        return t.reshape(b, s, nh, d).transpose(0, 2, 1, 3)

    q, k, v = sh(q), sh(k), sh(v)
    scores = jnp.einsum("bhqd,bhkd->bhqk", q, k) / math.sqrt(d)
    scores = scores + attention_mask
    probs = jax.nn.softmax(scores, axis=-1)
    ctx = jnp.einsum("bhqk,bhkd->bhqd", probs, v)
    return ctx.transpose(0, 2, 1, 3).reshape(b, s, h)


if __name__ == "__main__":
    B, S, H, NH = 2, 8, 32, 4

    key = jax.random.PRNGKey(0)
    k_param, k_x, k_mask = jax.random.split(key, 3)

    module = BertSelfAttentionPallas(H, NH, k_param)

    hidden_states = jax.random.normal(k_x, (B, S, H), jnp.float32)
    # Standard BERT additive mask: 0 for keep, -10000 for padded positions.
    keep = (jax.random.uniform(k_mask, (B, 1, 1, S)) > 0.2).astype(jnp.float32)
    attention_mask = (1.0 - keep) * -10000.0

    out = module(hidden_states, attention_mask)
    out = jax.block_until_ready(out)

    ref = _reference(module, hidden_states, attention_mask)
    # Tolerance accounts for the EUP approximate reciprocal in the softmax.
    np.testing.assert_allclose(np.asarray(out), np.asarray(ref),
                               rtol=1e-2, atol=1e-2)

    print("KERNEL_OK")
</pallas_src>

<mosaic_0001>
module attributes {stable_mosaic.version = 11 : i64} {
  func.func @_qkv_proj_kernel(%arg0: i32, %arg1: memref<16x32xf32, #tpu.memory_space<vmem>>, %arg2: memref<32x96xf32, #tpu.memory_space<vmem>>, %arg3: memref<1x96xf32, #tpu.memory_space<vmem>>, %arg4: memref<16x32xf32, #tpu.memory_space<vmem>>, %arg5: memref<16x32xf32, #tpu.memory_space<vmem>>, %arg6: memref<16x32xf32, #tpu.memory_space<vmem>>) attributes {dimension_semantics = [#tpu.dimension_semantics<parallel>], iteration_bounds = array<i64: 1>, scalar_prefetch = 0 : i64, scratch_operands = 0 : i64, tpu.core_type = #tpu.core_type<tc>, window_params = [{transform_indices = @transform_0, window_bounds = array<i64: 16, 32>}, {pipeline_mode = #tpu.pipeline_mode<synchronous>, transform_indices = @transform_1, window_bounds = array<i64: 32, 96>}, {pipeline_mode = #tpu.pipeline_mode<synchronous>, transform_indices = @transform_2, window_bounds = array<i64: 1, 96>}, {transform_indices = @transform_3, window_bounds = array<i64: 16, 32>}, {transform_indices = @transform_4, window_bounds = array<i64: 16, 32>}, {transform_indices = @transform_5, window_bounds = array<i64: 16, 32>}]} {
    %c0 = arith.constant 0 : index
    %c0_0 = arith.constant 0 : index
    %0 = vector.load %arg1[%c0, %c0_0] : memref<16x32xf32, #tpu.memory_space<vmem>>, vector<16x32xf32>
    %c0_1 = arith.constant 0 : index
    %c0_2 = arith.constant 0 : index
    %1 = vector.load %arg2[%c0_1, %c0_2] : memref<32x96xf32, #tpu.memory_space<vmem>>, vector<32x96xf32>
    %cst = arith.constant dense<0.000000e+00> : vector<16x96xf32>
    %2 = tpu.matmul %0, %1, %cst {dimension_numbers = #tpu.dot_dimension_numbers<[1], [0], [0], [1], [0, 0, 1, 1], [], []>} : vector<16x32xf32>, vector<32x96xf32>, vector<16x96xf32> -> vector<16x96xf32>
    %c0_3 = arith.constant 0 : index
    %c0_4 = arith.constant 0 : index
    %3 = vector.load %arg3[%c0_3, %c0_4] : memref<1x96xf32, #tpu.memory_space<vmem>>, vector<1x96xf32>
    %4 = vector.broadcast %3 : vector<1x96xf32> to vector<16x96xf32>
    %5 = arith.addf %2, %4 : vector<16x96xf32>
    %6 = vector.extract_strided_slice %5 {offsets = [0, 0], sizes = [16, 32], strides = [1, 1]} : vector<16x96xf32> to vector<16x32xf32>
    %c0_5 = arith.constant 0 : index
    %c0_6 = arith.constant 0 : index
    %7 = vector.load %arg4[%c0_5, %c0_6] : memref<16x32xf32, #tpu.memory_space<vmem>>, vector<16x32xf32>
    tpu.vector_store %arg4[%c0_5, %c0_6], %6 {strides = array<i32>} : memref<16x32xf32, #tpu.memory_space<vmem>>, vector<16x32xf32>,
    %8 = vector.extract_strided_slice %5 {offsets = [0, 32], sizes = [16, 32], strides = [1, 1]} : vector<16x96xf32> to vector<16x32xf32>
    %c0_7 = arith.constant 0 : index
    %c0_8 = arith.constant 0 : index
    %9 = vector.load %arg5[%c0_7, %c0_8] : memref<16x32xf32, #tpu.memory_space<vmem>>, vector<16x32xf32>
    tpu.vector_store %arg5[%c0_7, %c0_8], %8 {strides = array<i32>} : memref<16x32xf32, #tpu.memory_space<vmem>>, vector<16x32xf32>,
    %10 = vector.extract_strided_slice %5 {offsets = [0, 64], sizes = [16, 32], strides = [1, 1]} : vector<16x96xf32> to vector<16x32xf32>
    %c0_9 = arith.constant 0 : index
    %c0_10 = arith.constant 0 : index
    %11 = vector.load %arg6[%c0_9, %c0_10] : memref<16x32xf32, #tpu.memory_space<vmem>>, vector<16x32xf32>
    tpu.vector_store %arg6[%c0_9, %c0_10], %10 {strides = array<i32>} : memref<16x32xf32, #tpu.memory_space<vmem>>, vector<16x32xf32>,
    return
  }
  func.func @transform_0(%arg0: i32) -> (i32, i32) {
    %c0_i32 = arith.constant 0 : i32
    %c0_i32_0 = arith.constant 0 : i32
    return %arg0, %c0_i32 : i32, i32
  }
  func.func @transform_1(%arg0: i32) -> (i32, i32) {
    %c0_i32 = arith.constant 0 : i32
    %c0_i32_0 = arith.constant 0 : i32
    %c0_i32_1 = arith.constant 0 : i32
    return %c0_i32, %c0_i32_0 : i32, i32
  }
  func.func @transform_2(%arg0: i32) -> (i32, i32) {
    %c0_i32 = arith.constant 0 : i32
    %c0_i32_0 = arith.constant 0 : i32
    %c0_i32_1 = arith.constant 0 : i32
    return %c0_i32, %c0_i32_0 : i32, i32
  }
  func.func @transform_3(%arg0: i32) -> (i32, i32) {
    %c0_i32 = arith.constant 0 : i32
    %c0_i32_0 = arith.constant 0 : i32
    return %arg0, %c0_i32 : i32, i32
  }
  func.func @transform_4(%arg0: i32) -> (i32, i32) {
    %c0_i32 = arith.constant 0 : i32
    %c0_i32_0 = arith.constant 0 : i32
    return %arg0, %c0_i32 : i32, i32
  }
  func.func @transform_5(%arg0: i32) -> (i32, i32) {
    %c0_i32 = arith.constant 0 : i32
    %c0_i32_0 = arith.constant 0 : i32
    return %arg0, %c0_i32 : i32, i32
  }
}

</mosaic_0001>

<llo_original>
// kernel: tpu_custom_call.1
$region0: #{tpu_custom_call.1}
  #allocation0 [shape = 'u32[]', space=smem, size = 0x4, offset = 0x4, fixed_abs, tag = 'smem constant byte address 0x4 - core index']
  #allocation1 [shape = 'u32[144,128]{1,0:T(1,128)}', space=vmem, size = 0x12000, scoped, tag = 'internal scratch']
  %s0 = inlined_call_operand.hbm [shape: f32[16,32], index: 0, kind: input, shape index: {}]
  %s1 = inlined_call_operand.hbm [shape: f32[32,96], index: 1, kind: input, shape index: {}]
  %s2 = inlined_call_operand.vmem [shape: f32[1,96], index: 2, kind: input, shape index: {}]
  %s3 = inlined_call_operand.hbm [shape: f32[16,32], index: 3, kind: output, shape index: {0}]
  %s4 = inlined_call_operand.hbm [shape: f32[16,32], index: 4, kind: output, shape index: {1}]
  %s5 = inlined_call_operand.hbm [shape: f32[16,32], index: 5, kind: output, shape index: {2}]
  %6 = xla_tuple %s3, %s4, %s5
  %s7 = sld [smem:[#allocation0]]
  $region46: #{tpu_custom_call.1} parent=0
    _
  %s9 = ssub.s32 1, %s7
  %s10 = scalar_select 0, %s9, %s7
  $region1: #{tpu_custom_call.1} parent=0
    #allocation2 [shape = 'u8[8192]{0}', space=vmem, size = 0x2000, scoped, tag = 'input window, operand 0, single buffered']
    #allocation3 [shape = 's32[1]{0}', space=sflag, size = 0x4, scoped, tag = 'scoped memory for tpu_custom_call.1']
    #allocation4 [shape = 's32[1]{0}', space=sflag, size = 0x4, scoped, tag = 'scoped memory for tpu_custom_call.1']
    #allocation5 [shape = 'u8[16384]{0}', space=vmem, size = 0x4000, scoped, tag = 'input window, operand 1, single buffered']
    #allocation6 [shape = 's32[1]{0}', space=sflag, size = 0x4, scoped, tag = 'scoped memory for tpu_custom_call.1']
    #allocation7 [shape = 'u8[8192]{0}', space=vmem, size = 0x2000, scoped, tag = 'output window, operand 0, single buffered']
    #allocation8 [shape = 'u8[8192]{0}', space=vmem, size = 0x2000, scoped, tag = 'output window, operand 1, single buffered']
    #allocation9 [shape = 's32[1]{0}', space=sflag, size = 0x4, scoped, tag = 'scoped memory for tpu_custom_call.1']
    #allocation10 [shape = 'u8[8192]{0}', space=vmem, size = 0x2000, scoped, tag = 'output window, operand 2, single buffered']
    %11 = vsyncpa [#allocation3], 0
    %12 = vsyncpa [#allocation6], 0
    %13 = vsyncpa [#allocation4], 0
    %14 = vsyncpa [#allocation9], 0
    // Predicated region
    $region2: #{tpu_custom_call.1} parent=1 // pred_check
      _
    $region3: #{tpu_custom_call.1} parent=1 // pred_check_branch
      %16 = sbr.rel (0) target = $region5
    $region4: #{tpu_custom_call.1} parent=1 // pred_region
      %s18 = ssub.s32 256, 256
      %19 = vsyncadd [#allocation3], %s18
      %s20 = sshll.u32 [#allocation2], 4
      %s21 = int_to_ptr.vmem [resolvable:$true] %s20
      %26 = dma.hbm_to_vmem [thread:$0]  %s0, 256, %s21, [#allocation3], 128, 128, 8
    $region5: #{tpu_custom_call.1} parent=1 // pred_fallthru
      _
    // Predicated region
    $region6: #{tpu_custom_call.1} parent=1 // pred_check
      _
    $region7: #{tpu_custom_call.1} parent=1 // pred_check_branch
      %28 = sbr.rel (0) target = $region9
    $region8: #{tpu_custom_call.1} parent=1 // pred_region
      %s30 = ssub.s32 512, 512
      %31 = vsyncadd [#allocation6], %s30
      %s32 = sshll.u32 [#allocation5], 4
      %s33 = int_to_ptr.vmem [resolvable:$true] %s32
      %38 = dma.hbm_to_vmem [thread:$0]  %s1, 512, %s33, [#allocation6], 128, 128, 8
    $region9: #{tpu_custom_call.1} parent=1 // pred_fallthru
      _
    // Predicated region
    $region10: #{tpu_custom_call.1} parent=1 // pred_check
      _
    $region11: #{tpu_custom_call.1} parent=1 // pred_check_branch
      %40 = sbr.rel (0) target = $region13
    $region12: #{tpu_custom_call.1} parent=1 // pred_region
      _
    $region13: #{tpu_custom_call.1} parent=1 // pred_fallthru
      _
    // Predicated region
    $region14: #{tpu_custom_call.1} parent=1 // pred_check
      _
    $region15: #{tpu_custom_call.1} parent=1 // pred_check_branch
      %42 = sbr.rel (0) target = $region17
    $region16: #{tpu_custom_call.1} parent=1 // pred_region
      %43 = dma.done [#allocation3], 256
    $region17: #{tpu_custom_call.1} parent=1 // pred_fallthru
      _
    // Predicated region
    $region18: #{tpu_custom_call.1} parent=1 // pred_check
      _
    $region19: #{tpu_custom_call.1} parent=1 // pred_check_branch
      %45 = sbr.rel (0) target = $region21
    $region20: #{tpu_custom_call.1} parent=1 // pred_region
      %46 = dma.done [#allocation6], 512
    $region21: #{tpu_custom_call.1} parent=1 // pred_fallthru
      _
    %v47 = vld [vmem:[#allocation2] sm:$0xff]
    %v48 = vld [vmem:[#allocation2 + $0x8] sm:$0xff]
    %v49 = vld [vmem:[#allocation5] sm:$0xff]
    %v50 = vld [vmem:[#allocation5 + $0x8] sm:$0xff]
    %v51 = vld [vmem:[#allocation5 + $0x10] sm:$0xff]
    %v52 = vld [vmem:[#allocation5 + $0x18] sm:$0xff]
    %v53 = vld [vmem:[%s2] sm:$0x1]
    %v55 = vlaneseq
    %v56 = vshrl.u32 %v55, 7
    %v57 = vsub.s32 0, %v56
    %v58 = vrot.slane %v53, %v57
    %vm60 = vcmask 261120
    %v62 = vsel %vm60, %v47, 0
    %v65 = vsel %vm60, %v48, 0
    %67 = vmatprep.subr.mxu0 0.0
    %68 = vmatpush1.msra.mxu0 0.0
    %69 = vmatprep.subr.mxu0 0.0
    %70 = vmatpush1.msra.mxu0 0.0
    %71 = vmatprep.subr.mxu0 0.0
    %72 = vmatpush1.msra.mxu0 0.0
    %73 = vmatprep.subr.mxu0 0.0
    %74 = vmatpush1.msra.mxu0 0.0
    %75 = vmatprep.subr.mxu0 0.0
    %76 = vmatpush1.msra.mxu0 0.0
    %77 = vmatprep.subr.mxu0 0.0
    %78 = vmatpush1.msra.mxu0 0.0
    %79 = vmatprep.subr.mxu0 0.0
    %80 = vmatpush1.msra.mxu0 0.0
    %81 = vmatprep.subr.mxu0 0.0
    %82 = vmatpush1.msra.mxu0 0.0
    %83 = vmatprep.subr.mxu0 0.0
    %84 = vmatpush1.msra.mxu0 0.0
    %85 = vmatprep.subr.mxu0 0.0
    %86 = vmatpush1.msra.mxu0 0.0
    %87 = vmatprep.subr.mxu0 0.0
    %88 = vmatpush1.msra.mxu0 0.0
    %89 = vmatprep.subr.mxu0 0.0
    %90 = vmatpush1.msra.mxu0 0.0
    %91 = vmatprep.subr.mxu0 0.0
    %92 = vmatpush1.msra.mxu0 %v52
    %93 = vmatprep.subr.mxu0 0.0
    %94 = vmatpush1.msra.mxu0 %v51
    %95 = vmatprep.subr.mxu0 0.0
    %96 = vmatpush1.msra.mxu0 %v50
    %97 = vmatprep.subr.mxu0 0.0
    %98 = vmatpush1.msra.mxu0 %v49
    %99 = vmatprep.subr.mxu0 0.0
    %100 = vmatpush2.msra.mxu0 0.0
    %101 = vmatprep.subr.mxu0 0.0
    %102 = vmatpush2.msra.mxu0 0.0
    %103 = vmatprep.subr.mxu0 0.0
    %104 = vmatpush2.msra.mxu0 0.0
    %105 = vmatprep.subr.mxu0 0.0
    %106 = vmatpush2.msra.mxu0 0.0
    %107 = vmatprep.subr.mxu0 0.0
    %108 = vmatpush2.msra.mxu0 0.0
    %109 = vmatprep.subr.mxu0 0.0
    %110 = vmatpush2.msra.mxu0 0.0
    %111 = vmatprep.subr.mxu0 0.0
    %112 = vmatpush2.msra.mxu0 0.0
    %113 = vmatprep.subr.mxu0 0.0
    %114 = vmatpush2.msra.mxu0 0.0
    %115 = vmatprep.subr.mxu0 0.0
    %116 = vmatpush2.msra.mxu0 0.0
    %117 = vmatprep.subr.mxu0 0.0
    %118 = vmatpush2.msra.mxu0 0.0
    %119 = vmatprep.subr.mxu0 0.0
    %120 = vmatpush2.msra.mxu0 0.0
    %121 = vmatprep.subr.mxu0 0.0
    %122 = vmatpush2.msra.mxu0 0.0
    %123 = vmatprep.subr.mxu0 0.0
    %124 = vmatpush2.msra.mxu0 0.0
    %125 = vmatprep.subr.mxu0 0.0
    %126 = vmatpush2.msra.mxu0 0.0
    %127 = vmatprep.subr.mxu0 0.0
    %128 = vmatpush2.msra.mxu0 0.0
    %129 = vmatprep.subr.mxu0 0.0
    %130 = vmatpush2.msra.mxu0 0.0
    %131 = vmatprep.mubr.f32.mxu0 0.0
    %132 = vmatmul.mubr.f32.gmra.mxu0 %v62
    %v133 = vpop.f32.mrf.mxu0
    %v134 = vadd.f32 %v58, %v133
    %v135 = vpop.f32.mrf.mxu0
    %136 = vmatprep.mubr.f32.mxu0 0.0
    %137 = vmatmul.mubr.f32.gmra.mxu0 %v65
    %v138 = vpop.f32.mrf.mxu0
    %v139 = vadd.f32 %v58, %v138
    %v140 = vpop.f32.mrf.mxu0
    %141 = vdwg.mxu0
    %142 = vst.msk [vmem:[#allocation7] sm:$0xff] %vm60, %v134
    %143 = vst.msk [vmem:[#allocation7 + $0x8] sm:$0xff] %vm60, %v139
    %146 = vrot.lane.b32.xlu0 %v134, 96
    %v147 = vpop.permute.xlu0 %146
    %148 = vrot.lane.b32.xlu0 %v139, 96
    %v149 = vpop.permute.xlu0 %148
    %152 = vst.msk [vmem:[#allocation8] sm:$0xff] %vm60, %v147
    %153 = vst.msk [vmem:[#allocation8 + $0x8] sm:$0xff] %vm60, %v149
    %154 = vrot.lane.b32.xlu0 %v134, 64
    %v155 = vpop.permute.xlu0 %154
    %156 = vrot.lane.b32.xlu0 %v139, 64
    %v157 = vpop.permute.xlu0 %156
    %160 = vst.msk [vmem:[#allocation10] sm:$0xff] %vm60, %v155
    %161 = vst.msk [vmem:[#allocation10 + $0x8] sm:$0xff] %vm60, %v157
    // Predicated region
    $region22: #{tpu_custom_call.1} parent=1 // pred_check
      _
    $region23: #{tpu_custom_call.1} parent=1 // pred_check_branch
      %163 = sbr.rel (0) target = $region25
    $region24: #{tpu_custom_call.1} parent=1 // pred_region
      %s165 = ssub.s32 256, 256
      %166 = vsyncadd [#allocation4], %s165
      %s167 = sshll.u32 [#allocation7], 4
      %s168 = int_to_ptr.vmem [resolvable:$true] %s167
      %173 = dma.vmem_to_hbm [thread:$0]  %s168, 256, %s3, [#allocation4], 128, 128, 8
    $region25: #{tpu_custom_call.1} parent=1 // pred_fallthru
      _
    // Predicated region
    $region26: #{tpu_custom_call.1} parent=1 // pred_check
      _
    $region27: #{tpu_custom_call.1} parent=1 // pred_check_branch
      %175 = sbr.rel (0) target = $region29
    $region28: #{tpu_custom_call.1} parent=1 // pred_region
      %s177 = ssub.s32 256, 256
      %178 = vsyncadd [#allocation9], %s177
      %s179 = sshll.u32 [#allocation8], 4
      %s180 = int_to_ptr.vmem [resolvable:$true] %s179
      %185 = dma.vmem_to_hbm [thread:$0]  %s180, 256, %s4, [#allocation9], 128, 128, 8
    $region29: #{tpu_custom_call.1} parent=1 // pred_fallthru
      _
    // Predicated region
    $region30: #{tpu_custom_call.1} parent=1 // pred_check
      _
    $region31: #{tpu_custom_call.1} parent=1 // pred_check_branch
      %187 = sbr.rel (0) target = $region33
    $region32: #{tpu_custom_call.1} parent=1 // pred_region
      %s189 = ssub.s32 256, 256
      %190 = vsyncadd [#allocation9], %s189
      %s191 = sshll.u32 [#allocation10], 4
      %s192 = int_to_ptr.vmem [resolvable:$true] %s191
      %197 = dma.vmem_to_hbm [thread:$0]  %s192, 256, %s5, [#allocation9], 128, 128, 8
    $region33: #{tpu_custom_call.1} parent=1 // pred_fallthru
      _
    // Predicated region
    $region34: #{tpu_custom_call.1} parent=1 // pred_check
      _
    $region35: #{tpu_custom_call.1} parent=1 // pred_check_branch
      %199 = sbr.rel (0) target = $region37
    $region36: #{tpu_custom_call.1} parent=1 // pred_region
      %200 = dma.done [#allocation4], 256
    $region37: #{tpu_custom_call.1} parent=1 // pred_fallthru
      _
    // Predicated region
    $region38: #{tpu_custom_call.1} parent=1 // pred_check
      _
    $region39: #{tpu_custom_call.1} parent=1 // pred_check_branch
      %202 = sbr.rel (0) target = $region41
    $region40: #{tpu_custom_call.1} parent=1 // pred_region
      %203 = dma.done [#allocation9], 256
    $region41: #{tpu_custom_call.1} parent=1 // pred_fallthru
      _
    // Predicated region
    $region42: #{tpu_custom_call.1} parent=1 // pred_check
      _
    $region43: #{tpu_custom_call.1} parent=1 // pred_check_branch
      %205 = sbr.rel (0) target = $region45
    $region44: #{tpu_custom_call.1} parent=1 // pred_region
      %206 = dma.done [#allocation9], 256
    $region45: #{tpu_custom_call.1} parent=1 // pred_fallthru
      _
    %207 = vsyncpa [#allocation3], 1
    %208 = vsyncpa [#allocation6], 1
    %209 = vsyncpa [#allocation4], 1
    %210 = vsyncpa [#allocation9], 1

</llo_original>
